<compile_context>
chip_gen: v7x
topology: tpu7x:2x2x1
jax: 0.10.0
libtpu: 0.0.40
codegen_flags: <defaults>
</compile_context>

<pallas_src>
import math

import jax
import jax.numpy as jnp
from jax.experimental import pallas as pl
from jax.experimental.pallas import tpu as pltpu

_LANE = 128


# ---------------------------------------------------------------------------
# Kernels
# ---------------------------------------------------------------------------

def _merged_linear_kernel(z_ref, zf_ref, wc_ref, we_ref, b_ref, out_ref):
    # out = concat([z, z_future], -1) @ [Wc; We] + b, without materializing the
    # concat (no lane-crossing relayout for rep_dim not a multiple of 128).
    acc = jnp.dot(z_ref[...], wc_ref[...], preferred_element_type=jnp.float32)
    acc = acc + jnp.dot(zf_ref[...], we_ref[...], preferred_element_type=jnp.float32)
    out_ref[...] = (acc + b_ref[...]).astype(out_ref.dtype)


def _single_linear_kernel(z_ref, w_ref, b_ref, out_ref):
    # Single-stream path: plain Linear (use_extra_context=False, or the caller
    # already provides a contiguous merged (B, 2*rep_dim) activation).
    acc = jnp.dot(z_ref[...], w_ref[...], preferred_element_type=jnp.float32)
    out_ref[...] = (acc + b_ref[...]).astype(out_ref.dtype)


# ---------------------------------------------------------------------------
# Host-side helpers
# ---------------------------------------------------------------------------

def _round_up(x, m):
    return ((x + m - 1) // m) * m


def _batch_tile(B, tile_b, num_tensorcores=1):
    """Sublane-aligned batch tile.

    Whole batch in one block when it fits and a single core suffices;
    otherwise a multiple-of-8 tile capped at tile_b, with at least
    `num_tensorcores` grid steps so the "parallel" batch axis can shard
    across TensorCores (pass num_tensorcores=2 on v7x)."""
    if B <= tile_b and num_tensorcores <= 1:
        return B
    tb = min(tile_b, _round_up(pl.cdiv(B, num_tensorcores), 8))
    return max(8, tb)


def _resident_spec(arr):
    # Full-array block pinned to (0, 0): stays VMEM-resident across grid steps.
    return pl.BlockSpec(arr.shape, lambda i: (0, 0))


def _compiler_params(TB, D, A_pad, n_act_streams, act_itemsize):
    # Estimate the pipelined VMEM footprint (double-buffered activation tiles
    # and output tile + resident weights/bias) and only override the scoped
    # VMEM limit when it would not fit v5e's 16 MiB default.  Cap well below
    # v7x's 64 MiB physical VMEM.
    est = (n_act_streams * 2 * TB * D * act_itemsize     # double-buffered inputs
           + 2 * TB * A_pad * 4                          # double-buffered output (f32)
           + n_act_streams * D * A_pad * 4 + A_pad * 4)  # resident weights + bias
    kwargs = dict(dimension_semantics=("parallel",))
    if est > (14 << 20):
        kwargs["vmem_limit_bytes"] = min(int(est * 1.5) + (4 << 20), 48 << 20)
    return pltpu.CompilerParams(**kwargs)


def _call_merged_linear(z, z_future, w_ctx, w_ext, b, *, tile_b, num_tensorcores):
    B, D = z.shape
    A_pad = w_ctx.shape[1]
    TB = _batch_tile(B, tile_b, num_tensorcores)
    row_spec = pl.BlockSpec((TB, D), lambda i: (i, 0))
    # NOTE: if profiling at large TB shows exposed input DMA, add
    # pipeline_mode=pl.Buffered(3) to row_spec (weights stay resident).
    return pl.pallas_call(
        _merged_linear_kernel,
        out_shape=jax.ShapeDtypeStruct((B, A_pad), jnp.float32),
        grid=(pl.cdiv(B, TB),),
        in_specs=[row_spec, row_spec,
                  _resident_spec(w_ctx), _resident_spec(w_ext), _resident_spec(b)],
        out_specs=pl.BlockSpec((TB, A_pad), lambda i: (i, 0)),
        compiler_params=_compiler_params(TB, D, A_pad, 2, z.dtype.itemsize),
    )(z, z_future, w_ctx, w_ext, b)


def _call_single_linear(z, w, b, *, tile_b, num_tensorcores):
    B, D = z.shape
    A_pad = w.shape[1]
    TB = _batch_tile(B, tile_b, num_tensorcores)
    return pl.pallas_call(
        _single_linear_kernel,
        out_shape=jax.ShapeDtypeStruct((B, A_pad), jnp.float32),
        grid=(pl.cdiv(B, TB),),
        in_specs=[pl.BlockSpec((TB, D), lambda i: (i, 0)),
                  _resident_spec(w), _resident_spec(b)],
        out_specs=pl.BlockSpec((TB, A_pad), lambda i: (i, 0)),
        compiler_params=_compiler_params(TB, D, A_pad, 1, z.dtype.itemsize),
    )(z, w, b)


# ---------------------------------------------------------------------------
# Public forward + param init
# ---------------------------------------------------------------------------

def action_prediction_head_forward(z_mean, extra_z_mean, params, *,
                                   tile_b=4096,
                                   num_tensorcores=1,
                                   stream_dtype=None,
                                   small_batch_threshold=1024,
                                   force_pallas=False):
    """ActionPredictionHead.forward (sample=False -> distribution means as inputs).

    params (weights pre-transposed to (in_features, out_features), output dim
    zero-padded to a multiple of 128 lanes; `out_dim` stores the real width):
      split weight (two activation streams): {"w_ctx", "w_ext", "b", "out_dim"[, "log_std"]}
      unsplit weight (single stream):         {"w",            "b", "out_dim"[, "log_std"]}
    Returns {"action_logits"} (Categorical) or {"mean_actions", "stddev"} (DiagGaussian).
    """
    A = params["out_dim"]
    B = z_mean.shape[0]

    if stream_dtype is not None:
        z_mean = z_mean.astype(stream_dtype)
        if extra_z_mean is not None:
            extra_z_mean = extra_z_mean.astype(stream_dtype)

    use_pallas = force_pallas or B >= small_batch_threshold

    if "w_ctx" in params:
        assert extra_z_mean is not None, "split-weight params require extra context"
        if use_pallas:
            out = _call_merged_linear(z_mean, extra_z_mean,
                                      params["w_ctx"], params["w_ext"], params["b"],
                                      tile_b=tile_b, num_tensorcores=num_tensorcores)
        else:
            out = (jnp.dot(z_mean, params["w_ctx"], preferred_element_type=jnp.float32)
                   + jnp.dot(extra_z_mean, params["w_ext"], preferred_element_type=jnp.float32)
                   + params["b"])
    else:
        # Single contiguous activation stream (use_extra_context=False, or the
        # encoder already emits the merged (B, 2*rep_dim) array).  No wrapper
        # concat is ever emitted.
        assert extra_z_mean is None, "unsplit-weight params expect a single input stream"
        if use_pallas:
            out = _call_single_linear(z_mean, params["w"], params["b"],
                                      tile_b=tile_b, num_tensorcores=num_tensorcores)
        else:
            out = jnp.dot(z_mean, params["w"], preferred_element_type=jnp.float32) + params["b"]

    if out.shape[1] != A:
        out = out[:, :A]   # drop the zero lane padding

    if "log_std" in params:
        # DiagGaussian: std is a learned per-action parameter with no dependence
        # on z -- broadcast it in the wrapper (constant-foldable) instead of
        # paying an output DMA inside the kernel.
        std = jnp.broadcast_to(jnp.exp(params["log_std"]).reshape(1, -1), out.shape)
        return {"mean_actions": out, "stddev": std}
    return {"action_logits": out}


def init_params(key, rep_dim, action_dim, *, use_extra_context=True, continuous=False,
                split_weight=True):
    """Mirror nn.Linear default init (uniform +/- 1/sqrt(fan_in)) for the
    proba_distribution_net Linear; log_std init 0.0 (SB3 default).

    The weight is stored pre-transposed (in, out), zero-padded along the output
    dim to a multiple of 128 lanes (lane-dense stores in the kernel), and --
    when two activation streams are used -- pre-split into context /
    extra-context halves.  `out_dim` records the unpadded action dim."""
    latent_dim = 2 * rep_dim if use_extra_context else rep_dim
    kw, kb = jax.random.split(key)
    bound = 1.0 / math.sqrt(float(latent_dim))
    w = jax.random.uniform(kw, (latent_dim, action_dim), jnp.float32, -bound, bound)
    b = jax.random.uniform(kb, (1, action_dim), jnp.float32, -bound, bound)

    a_pad = max(_LANE, _round_up(action_dim, _LANE))
    w_p = jnp.zeros((latent_dim, a_pad), jnp.float32).at[:, :action_dim].set(w)
    b_p = jnp.zeros((1, a_pad), jnp.float32).at[:, :action_dim].set(b)

    params = {"b": b_p, "out_dim": action_dim}
    if use_extra_context and split_weight:
        params["w_ctx"] = w_p[:rep_dim]
        params["w_ext"] = w_p[rep_dim:]
    else:
        params["w"] = w_p
    if continuous:
        params["log_std"] = jnp.zeros((action_dim,), jnp.float32)
    return params


def _reference_linear(z, z_future, params):
    A = params["out_dim"]
    if "w_ctx" in params:
        w = jnp.concatenate([params["w_ctx"], params["w_ext"]], axis=0)[:, :A]
        x = jnp.concatenate([z, z_future], axis=1)
    else:
        w = params["w"][:, :A]
        x = z if z_future is None else jnp.concatenate([z, z_future], axis=1)
    return x @ w + params["b"][:, :A]


if __name__ == "__main__":
    B, REP_DIM = 8, 32
    N_ACTIONS, ACT_DIM = 15, 6

    key = jax.random.PRNGKey(0)
    kz, kzf, kpd, kpc = jax.random.split(key, 4)
    z_mean = jax.random.normal(kz, (B, REP_DIM), dtype=jnp.float32)        # z_dist.mean
    zf_mean = jax.random.normal(kzf, (B, REP_DIM), dtype=jnp.float32)      # extra_context.mean

    # Discrete action space -> CategoricalDistribution (merged Linear -> logits).
    p_disc = init_params(kpd, REP_DIM, N_ACTIONS)
    dist_d = action_prediction_head_forward(z_mean, zf_mean, p_disc, force_pallas=True)
    jax.block_until_ready(dist_d)
    ref_logits = _reference_linear(z_mean, zf_mean, p_disc)
    assert dist_d["action_logits"].shape == (B, N_ACTIONS)
    assert jnp.allclose(dist_d["action_logits"], ref_logits, atol=1e-4, rtol=1e-4)

    # Box action space -> DiagGaussianDistribution (merged Linear -> mean, param log_std).
    p_cont = init_params(kpc, REP_DIM, ACT_DIM, continuous=True)
    dist_c = action_prediction_head_forward(z_mean, zf_mean, p_cont, force_pallas=True)
    jax.block_until_ready(dist_c)
    ref_mu = _reference_linear(z_mean, zf_mean, p_cont)
    assert dist_c["mean_actions"].shape == (B, ACT_DIM)
    assert jnp.allclose(dist_c["mean_actions"], ref_mu, atol=1e-4, rtol=1e-4)
    assert jnp.allclose(dist_c["stddev"], jnp.ones((B, ACT_DIM)))  # log_std init = 0

    # use_extra_context=False configuration (single stream, unsplit weight).
    p_noext = init_params(kpd, REP_DIM, N_ACTIONS, use_extra_context=False)
    dist_n = action_prediction_head_forward(z_mean, None, p_noext, force_pallas=True)
    jax.block_until_ready(dist_n)
    ref_n = _reference_linear(z_mean, None, p_noext)
    assert jnp.allclose(dist_n["action_logits"], ref_n, atol=1e-4, rtol=1e-4)

    # Multi-step grid with a non-dividing tail block and 2-TC-style tiling.
    B2 = 40
    kz2, kzf2 = jax.random.split(jax.random.PRNGKey(1))
    z2 = jax.random.normal(kz2, (B2, REP_DIM), dtype=jnp.float32)
    zf2 = jax.random.normal(kzf2, (B2, REP_DIM), dtype=jnp.float32)
    dist_t = action_prediction_head_forward(z2, zf2, p_disc, tile_b=16,
                                            num_tensorcores=2, force_pallas=True)
    jax.block_until_ready(dist_t)
    ref_t = _reference_linear(z2, zf2, p_disc)
    assert jnp.allclose(dist_t["action_logits"], ref_t, atol=1e-4, rtol=1e-4)

    # Small-batch fallback path (plain jnp, no Pallas launch).
    dist_f = action_prediction_head_forward(z_mean, zf_mean, p_disc)
    jax.block_until_ready(dist_f)
    assert jnp.allclose(dist_f["action_logits"], ref_logits, atol=1e-4, rtol=1e-4)

    print("KERNEL_OK")
</pallas_src>

<mosaic_0001>
module attributes {stable_mosaic.version = 11 : i64} {
  func.func @_merged_linear_kernel(%arg0: i32, %arg1: memref<8x32xf32, #tpu.memory_space<vmem>>, %arg2: memref<8x32xf32, #tpu.memory_space<vmem>>, %arg3: memref<32x128xf32, #tpu.memory_space<vmem>>, %arg4: memref<32x128xf32, #tpu.memory_space<vmem>>, %arg5: memref<1x128xf32, #tpu.memory_space<vmem>>, %arg6: memref<8x128xf32, #tpu.memory_space<vmem>>) attributes {dimension_semantics = [#tpu.dimension_semantics<parallel>], iteration_bounds = array<i64: 1>, scalar_prefetch = 0 : i64, scratch_operands = 0 : i64, tpu.core_type = #tpu.core_type<tc>, window_params = [{transform_indices = @transform_0, window_bounds = array<i64: 8, 32>}, {transform_indices = @transform_1, window_bounds = array<i64: 8, 32>}, {pipeline_mode = #tpu.pipeline_mode<synchronous>, transform_indices = @transform_2, window_bounds = array<i64: 32, 128>}, {pipeline_mode = #tpu.pipeline_mode<synchronous>, transform_indices = @transform_3, window_bounds = array<i64: 32, 128>}, {pipeline_mode = #tpu.pipeline_mode<synchronous>, transform_indices = @transform_4, window_bounds = array<i64: 1, 128>}, {transform_indices = @transform_5, window_bounds = array<i64: 8, 128>}]} {
    %c0 = arith.constant 0 : index
    %c0_0 = arith.constant 0 : index
    %0 = vector.load %arg1[%c0, %c0_0] : memref<8x32xf32, #tpu.memory_space<vmem>>, vector<8x32xf32>
    %c0_1 = arith.constant 0 : index
    %c0_2 = arith.constant 0 : index
    %1 = vector.load %arg3[%c0_1, %c0_2] : memref<32x128xf32, #tpu.memory_space<vmem>>, vector<32x128xf32>
    %cst = arith.constant dense<0.000000e+00> : vector<8x128xf32>
    %2 = tpu.matmul %0, %1, %cst {dimension_numbers = #tpu.dot_dimension_numbers<[1], [0], [0], [1], [0, 0, 1, 1], [], []>} : vector<8x32xf32>, vector<32x128xf32>, vector<8x128xf32> -> vector<8x128xf32>
    %c0_3 = arith.constant 0 : index
    %c0_4 = arith.constant 0 : index
    %3 = vector.load %arg2[%c0_3, %c0_4] : memref<8x32xf32, #tpu.memory_space<vmem>>, vector<8x32xf32>
    %c0_5 = arith.constant 0 : index
    %c0_6 = arith.constant 0 : index
    %4 = vector.load %arg4[%c0_5, %c0_6] : memref<32x128xf32, #tpu.memory_space<vmem>>, vector<32x128xf32>
    %cst_7 = arith.constant dense<0.000000e+00> : vector<8x128xf32>
    %5 = tpu.matmul %3, %4, %cst_7 {dimension_numbers = #tpu.dot_dimension_numbers<[1], [0], [0], [1], [0, 0, 1, 1], [], []>} : vector<8x32xf32>, vector<32x128xf32>, vector<8x128xf32> -> vector<8x128xf32>
    %6 = arith.addf %2, %5 : vector<8x128xf32>
    %c0_8 = arith.constant 0 : index
    %c0_9 = arith.constant 0 : index
    %7 = vector.load %arg5[%c0_8, %c0_9] : memref<1x128xf32, #tpu.memory_space<vmem>>, vector<1x128xf32>
    %8 = vector.broadcast %7 : vector<1x128xf32> to vector<8x128xf32>
    %9 = arith.addf %6, %8 : vector<8x128xf32>
    %c0_10 = arith.constant 0 : index
    %c0_11 = arith.constant 0 : index
    %10 = vector.load %arg6[%c0_10, %c0_11] : memref<8x128xf32, #tpu.memory_space<vmem>>, vector<8x128xf32>
    tpu.vector_store %arg6[%c0_10, %c0_11], %9 {strides = array<i32>} : memref<8x128xf32, #tpu.memory_space<vmem>>, vector<8x128xf32>,
    return
  }
  func.func @transform_0(%arg0: i32) -> (i32, i32) {
    %c0_i32 = arith.constant 0 : i32
    %c0_i32_0 = arith.constant 0 : i32
    return %arg0, %c0_i32 : i32, i32
  }
  func.func @transform_1(%arg0: i32) -> (i32, i32) {
    %c0_i32 = arith.constant 0 : i32
    %c0_i32_0 = arith.constant 0 : i32
    return %arg0, %c0_i32 : i32, i32
  }
  func.func @transform_2(%arg0: i32) -> (i32, i32) {
    %c0_i32 = arith.constant 0 : i32
    %c0_i32_0 = arith.constant 0 : i32
    %c0_i32_1 = arith.constant 0 : i32
    return %c0_i32, %c0_i32_0 : i32, i32
  }
  func.func @transform_3(%arg0: i32) -> (i32, i32) {
    %c0_i32 = arith.constant 0 : i32
    %c0_i32_0 = arith.constant 0 : i32
    %c0_i32_1 = arith.constant 0 : i32
    return %c0_i32, %c0_i32_0 : i32, i32
  }
  func.func @transform_4(%arg0: i32) -> (i32, i32) {
    %c0_i32 = arith.constant 0 : i32
    %c0_i32_0 = arith.constant 0 : i32
    %c0_i32_1 = arith.constant 0 : i32
    return %c0_i32, %c0_i32_0 : i32, i32
  }
  func.func @transform_5(%arg0: i32) -> (i32, i32) {
    %c0_i32 = arith.constant 0 : i32
    %c0_i32_0 = arith.constant 0 : i32
    return %arg0, %c0_i32 : i32, i32
  }
}

</mosaic_0001>

<llo_original>
// kernel: tpu_custom_call.1
$region0: #{tpu_custom_call.1}
  #allocation0 [shape = 'u32[]', space=smem, size = 0x4, offset = 0x4, fixed_abs, tag = 'smem constant byte address 0x4 - core index']
  #allocation1 [shape = 'u32[144,128]{1,0:T(1,128)}', space=vmem, size = 0x12000, scoped, tag = 'internal scratch']
  %s0 = inlined_call_operand.hbm [shape: f32[8,32], index: 0, kind: input, shape index: {}]
  %s1 = inlined_call_operand.hbm [shape: f32[8,32], index: 1, kind: input, shape index: {}]
  %s2 = inlined_call_operand.hbm [shape: f32[32,128], index: 2, kind: input, shape index: {}]
  %s3 = inlined_call_operand.hbm [shape: f32[32,128], index: 3, kind: input, shape index: {}]
  %s4 = inlined_call_operand.vmem [shape: f32[1,128], index: 4, kind: input, shape index: {}]
  %s5 = inlined_call_operand.hbm [shape: f32[8,128], index: 5, kind: output, shape index: {}]
  %s6 = sld [smem:[#allocation0]]
  $region46: #{tpu_custom_call.1} parent=0
    _
  %s8 = ssub.s32 1, %s6
  %s9 = scalar_select 0, %s8, %s6
  $region1: #{tpu_custom_call.1} parent=0
    #allocation2 [shape = 'u8[4096]{0}', space=vmem, size = 0x1000, scoped, tag = 'input window, operand 0, single buffered']
    #allocation3 [shape = 's32[1]{0}', space=sflag, size = 0x4, scoped, tag = 'scoped memory for tpu_custom_call.1']
    #allocation4 [shape = 's32[1]{0}', space=sflag, size = 0x4, scoped, tag = 'scoped memory for tpu_custom_call.1']
    #allocation5 [shape = 'u8[4096]{0}', space=vmem, size = 0x1000, scoped, tag = 'input window, operand 1, single buffered']
    #allocation6 [shape = 's32[1]{0}', space=sflag, size = 0x4, scoped, tag = 'scoped memory for tpu_custom_call.1']
    #allocation7 [shape = 'u8[16384]{0}', space=vmem, size = 0x4000, scoped, tag = 'input window, operand 2, single buffered']
    #allocation8 [shape = 'u8[16384]{0}', space=vmem, size = 0x4000, scoped, tag = 'input window, operand 3, single buffered']
    #allocation9 [shape = 's32[1]{0}', space=sflag, size = 0x4, scoped, tag = 'scoped memory for tpu_custom_call.1']
    #allocation10 [shape = 'u8[4096]{0}', space=vmem, size = 0x1000, scoped, tag = 'output window, operand 0, single buffered']
    %10 = vsyncpa [#allocation3], 0
    %11 = vsyncpa [#allocation6], 0
    %12 = vsyncpa [#allocation9], 0
    %13 = vsyncpa [#allocation4], 0
    // Predicated region
    $region2: #{tpu_custom_call.1} parent=1 // pred_check
      _
    $region3: #{tpu_custom_call.1} parent=1 // pred_check_branch
      %15 = sbr.rel (0) target = $region5
    $region4: #{tpu_custom_call.1} parent=1 // pred_region
      %s17 = ssub.s32 128, 128
      %18 = vsyncadd [#allocation3], %s17
      %s20 = sshll.u32 [#allocation2], 4
      %s21 = int_to_ptr.vmem [resolvable:$true] %s20
      %23 = dma.hbm_to_vmem [thread:$0]  %s0, 128, %s21, [#allocation3]
    $region5: #{tpu_custom_call.1} parent=1 // pred_fallthru
      _
    // Predicated region
    $region6: #{tpu_custom_call.1} parent=1 // pred_check
      _
    $region7: #{tpu_custom_call.1} parent=1 // pred_check_branch
      %25 = sbr.rel (0) target = $region9
    $region8: #{tpu_custom_call.1} parent=1 // pred_region
      %s27 = ssub.s32 128, 128
      %28 = vsyncadd [#allocation6], %s27
      %s30 = sshll.u32 [#allocation5], 4
      %s31 = int_to_ptr.vmem [resolvable:$true] %s30
      %33 = dma.hbm_to_vmem [thread:$0]  %s1, 128, %s31, [#allocation6]
    $region9: #{tpu_custom_call.1} parent=1 // pred_fallthru
      _
    // Predicated region
    $region10: #{tpu_custom_call.1} parent=1 // pred_check
      _
    $region11: #{tpu_custom_call.1} parent=1 // pred_check_branch
      %35 = sbr.rel (0) target = $region13
    $region12: #{tpu_custom_call.1} parent=1 // pred_region
      %s37 = ssub.s32 512, 512
      %38 = vsyncadd [#allocation6], %s37
      %s39 = sshll.u32 [#allocation7], 4
      %s40 = int_to_ptr.vmem [resolvable:$true] %s39
      %45 = dma.hbm_to_vmem [thread:$0]  %s2, 512, %s40, [#allocation6], 128, 128, 8
    $region13: #{tpu_custom_call.1} parent=1 // pred_fallthru
      _
    // Predicated region
    $region14: #{tpu_custom_call.1} parent=1 // pred_check
      _
    $region15: #{tpu_custom_call.1} parent=1 // pred_check_branch
      %47 = sbr.rel (0) target = $region17
    $region16: #{tpu_custom_call.1} parent=1 // pred_region
      %s49 = ssub.s32 512, 512
      %50 = vsyncadd [#allocation9], %s49
      %s51 = sshll.u32 [#allocation8], 4
      %s52 = int_to_ptr.vmem [resolvable:$true] %s51
      %57 = dma.hbm_to_vmem [thread:$0]  %s3, 512, %s52, [#allocation9], 128, 128, 8
    $region17: #{tpu_custom_call.1} parent=1 // pred_fallthru
      _
    // Predicated region
    $region18: #{tpu_custom_call.1} parent=1 // pred_check
      _
    $region19: #{tpu_custom_call.1} parent=1 // pred_check_branch
      %59 = sbr.rel (0) target = $region21
    $region20: #{tpu_custom_call.1} parent=1 // pred_region
      _
    $region21: #{tpu_custom_call.1} parent=1 // pred_fallthru
      _
    // Predicated region
    $region22: #{tpu_custom_call.1} parent=1 // pred_check
      _
    $region23: #{tpu_custom_call.1} parent=1 // pred_check_branch
      %61 = sbr.rel (0) target = $region25
    $region24: #{tpu_custom_call.1} parent=1 // pred_region
      %62 = dma.done [#allocation3], 128
    $region25: #{tpu_custom_call.1} parent=1 // pred_fallthru
      _
    // Predicated region
    $region26: #{tpu_custom_call.1} parent=1 // pred_check
      _
    $region27: #{tpu_custom_call.1} parent=1 // pred_check_branch
      %64 = sbr.rel (0) target = $region29
    $region28: #{tpu_custom_call.1} parent=1 // pred_region
      %65 = dma.done [#allocation6], 128
    $region29: #{tpu_custom_call.1} parent=1 // pred_fallthru
      _
    // Predicated region
    $region30: #{tpu_custom_call.1} parent=1 // pred_check
      _
    $region31: #{tpu_custom_call.1} parent=1 // pred_check_branch
      %67 = sbr.rel (0) target = $region33
    $region32: #{tpu_custom_call.1} parent=1 // pred_region
      %68 = dma.done [#allocation6], 512
    $region33: #{tpu_custom_call.1} parent=1 // pred_fallthru
      _
    // Predicated region
    $region34: #{tpu_custom_call.1} parent=1 // pred_check
      _
    $region35: #{tpu_custom_call.1} parent=1 // pred_check_branch
      %70 = sbr.rel (0) target = $region37
    $region36: #{tpu_custom_call.1} parent=1 // pred_region
      %71 = dma.done [#allocation9], 512
    $region37: #{tpu_custom_call.1} parent=1 // pred_fallthru
      _
    %v72 = vld [vmem:[#allocation2] sm:$0xff]
    %v73 = vld [vmem:[#allocation7] sm:$0xff]
    %v74 = vld [vmem:[#allocation7 + $0x8] sm:$0xff]
    %v75 = vld [vmem:[#allocation7 + $0x10] sm:$0xff]
    %v76 = vld [vmem:[#allocation7 + $0x18] sm:$0xff]
    %v77 = vld [vmem:[#allocation5] sm:$0xff]
    %v78 = vld [vmem:[#allocation8] sm:$0xff]
    %v79 = vld [vmem:[#allocation8 + $0x8] sm:$0xff]
    %v80 = vld [vmem:[#allocation8 + $0x10] sm:$0xff]
    %v81 = vld [vmem:[#allocation8 + $0x18] sm:$0xff]
    %vm82 = vcmask 261120
    %v84 = vsel %vm82, %v77, 0
    %86 = vmatprep.subr.mxu0 0.0
    %87 = vmatpush1.msra.mxu0 %v78
    %88 = vmatprep.subr.mxu0 0.0
    %89 = vmatpush1.msra.mxu0 %v79
    %90 = vmatprep.subr.mxu0 0.0
    %91 = vmatpush1.msra.mxu0 %v80
    %92 = vmatprep.subr.mxu0 0.0
    %93 = vmatpush1.msra.mxu0 %v81
    %94 = vmatprep.subr.mxu0 0.0
    %95 = vmatpush1.msra.mxu0 0.0
    %96 = vmatprep.subr.mxu0 0.0
    %97 = vmatpush1.msra.mxu0 0.0
    %98 = vmatprep.subr.mxu0 0.0
    %99 = vmatpush1.msra.mxu0 0.0
    %100 = vmatprep.subr.mxu0 0.0
    %101 = vmatpush1.msra.mxu0 0.0
    %102 = vmatprep.subr.mxu0 0.0
    %103 = vmatpush1.msra.mxu0 0.0
    %104 = vmatprep.subr.mxu0 0.0
    %105 = vmatpush1.msra.mxu0 0.0
    %106 = vmatprep.subr.mxu0 0.0
    %107 = vmatpush1.msra.mxu0 0.0
    %108 = vmatprep.subr.mxu0 0.0
    %109 = vmatpush1.msra.mxu0 0.0
    %110 = vmatprep.subr.mxu0 0.0
    %111 = vmatpush1.msra.mxu0 0.0
    %112 = vmatprep.subr.mxu0 0.0
    %113 = vmatpush1.msra.mxu0 0.0
    %114 = vmatprep.subr.mxu0 0.0
    %115 = vmatpush1.msra.mxu0 0.0
    %116 = vmatprep.subr.mxu0 0.0
    %117 = vmatpush1.msra.mxu0 0.0
    %118 = vmatprep.subr.mxu0 0.0
    %119 = vmatpush1.msra.mxu0 0.0
    %120 = vmatprep.subr.mxu0 0.0
    %121 = vmatpush1.msra.mxu0 0.0
    %122 = vmatprep.subr.mxu0 0.0
    %123 = vmatpush1.msra.mxu0 0.0
    %124 = vmatprep.subr.mxu0 0.0
    %125 = vmatpush1.msra.mxu0 0.0
    %126 = vmatprep.subr.mxu0 0.0
    %127 = vmatpush1.msra.mxu0 0.0
    %128 = vmatprep.subr.mxu0 0.0
    %129 = vmatpush1.msra.mxu0 0.0
    %130 = vmatprep.subr.mxu0 0.0
    %131 = vmatpush1.msra.mxu0 0.0
    %132 = vmatprep.subr.mxu0 0.0
    %133 = vmatpush1.msra.mxu0 0.0
    %134 = vmatprep.subr.mxu0 0.0
    %135 = vmatpush1.msra.mxu0 0.0
    %136 = vmatprep.subr.mxu0 0.0
    %137 = vmatpush1.msra.mxu0 0.0
    %138 = vmatprep.subr.mxu0 0.0
    %139 = vmatpush1.msra.mxu0 0.0
    %140 = vmatprep.subr.mxu0 0.0
    %141 = vmatpush1.msra.mxu0 0.0
    %142 = vmatprep.subr.mxu0 0.0
    %143 = vmatpush1.msra.mxu0 0.0
    %144 = vmatprep.subr.mxu0 0.0
    %145 = vmatpush1.msra.mxu0 0.0
    %146 = vmatprep.subr.mxu0 0.0
    %147 = vmatpush1.msra.mxu0 0.0
    %148 = vmatprep.subr.mxu0 0.0
    %149 = vmatpush1.msra.mxu0 0.0
    %150 = vmatprep.mubr.f32.mxu0 0.0
    %151 = vmatmul.mubr.f32.gmra.mrb[0].mxu0 %v84
    %v152 = vpop.f32.mrb[0].mxu0
    %v153 = vadd.f32 0.0, %v152
    %v154 = vpop.f32.mrb[0].mxu0
    %155 = vdwg.mxu0
    %v157 = vsel %vm82, %v72, 0
    %159 = vmatprep.subr.mxu0 0.0
    %160 = vmatpush1.msra.mxu0 %v73
    %161 = vmatprep.subr.mxu0 0.0
    %162 = vmatpush1.msra.mxu0 %v74
    %163 = vmatprep.subr.mxu0 0.0
    %164 = vmatpush1.msra.mxu0 %v75
    %165 = vmatprep.subr.mxu0 0.0
    %166 = vmatpush1.msra.mxu0 %v76
    %167 = vmatprep.subr.mxu0 0.0
    %168 = vmatpush1.msra.mxu0 0.0
    %169 = vmatprep.subr.mxu0 0.0
    %170 = vmatpush1.msra.mxu0 0.0
    %171 = vmatprep.subr.mxu0 0.0
    %172 = vmatpush1.msra.mxu0 0.0
    %173 = vmatprep.subr.mxu0 0.0
    %174 = vmatpush1.msra.mxu0 0.0
    %175 = vmatprep.subr.mxu0 0.0
    %176 = vmatpush1.msra.mxu0 0.0
    %177 = vmatprep.subr.mxu0 0.0
    %178 = vmatpush1.msra.mxu0 0.0
    %179 = vmatprep.subr.mxu0 0.0
    %180 = vmatpush1.msra.mxu0 0.0
    %181 = vmatprep.subr.mxu0 0.0
    %182 = vmatpush1.msra.mxu0 0.0
    %183 = vmatprep.subr.mxu0 0.0
    %184 = vmatpush1.msra.mxu0 0.0
    %185 = vmatprep.subr.mxu0 0.0
    %186 = vmatpush1.msra.mxu0 0.0
    %187 = vmatprep.subr.mxu0 0.0
    %188 = vmatpush1.msra.mxu0 0.0
    %189 = vmatprep.subr.mxu0 0.0
    %190 = vmatpush1.msra.mxu0 0.0
    %191 = vmatprep.subr.mxu0 0.0
    %192 = vmatpush1.msra.mxu0 0.0
    %193 = vmatprep.subr.mxu0 0.0
    %194 = vmatpush1.msra.mxu0 0.0
    %195 = vmatprep.subr.mxu0 0.0
    %196 = vmatpush1.msra.mxu0 0.0
    %197 = vmatprep.subr.mxu0 0.0
    %198 = vmatpush1.msra.mxu0 0.0
    %199 = vmatprep.subr.mxu0 0.0
    %200 = vmatpush1.msra.mxu0 0.0
    %201 = vmatprep.subr.mxu0 0.0
    %202 = vmatpush1.msra.mxu0 0.0
    %203 = vmatprep.subr.mxu0 0.0
    %204 = vmatpush1.msra.mxu0 0.0
    %205 = vmatprep.subr.mxu0 0.0
    %206 = vmatpush1.msra.mxu0 0.0
    %207 = vmatprep.subr.mxu0 0.0
    %208 = vmatpush1.msra.mxu0 0.0
    %209 = vmatprep.subr.mxu0 0.0
    %210 = vmatpush1.msra.mxu0 0.0
    %211 = vmatprep.subr.mxu0 0.0
    %212 = vmatpush1.msra.mxu0 0.0
    %213 = vmatprep.subr.mxu0 0.0
    %214 = vmatpush1.msra.mxu0 0.0
    %215 = vmatprep.subr.mxu0 0.0
    %216 = vmatpush1.msra.mxu0 0.0
    %217 = vmatprep.subr.mxu0 0.0
    %218 = vmatpush1.msra.mxu0 0.0
    %219 = vmatprep.subr.mxu0 0.0
    %220 = vmatpush1.msra.mxu0 0.0
    %221 = vmatprep.subr.mxu0 0.0
    %222 = vmatpush1.msra.mxu0 0.0
    %223 = vmatprep.mubr.f32.mxu0 0.0
    %224 = vmatmul.mubr.f32.gmra.mrb[0].mxu0 %v157
    %v225 = vpop.f32.mrb[0].mxu0
    %v226 = vadd.f32 %v153, %v225
    %v227 = vpop.f32.mrb[0].mxu0
    %228 = vdwg.mxu0
    %v229 = vld [vmem:[%s4] sm:$0x1]
    %v231 = vlaneseq
    %v232 = vshrl.u32 %v231, 7
    %v233 = vsub.s32 0, %v232
    %v234 = vrot.slane %v229, %v233
    %v236 = vadd.f32 %v226, %v234
    %237 = vst [vmem:[#allocation10] sm:$0xff] %v236
    // Predicated region
    $region38: #{tpu_custom_call.1} parent=1 // pred_check
      _
    $region39: #{tpu_custom_call.1} parent=1 // pred_check_branch
      %239 = sbr.rel (0) target = $region41
    $region40: #{tpu_custom_call.1} parent=1 // pred_region
      %s241 = ssub.s32 128, 128
      %242 = vsyncadd [#allocation4], %s241
      %s244 = sshll.u32 [#allocation10], 4
      %s245 = int_to_ptr.vmem [resolvable:$true] %s244
      %247 = dma.vmem_to_hbm [thread:$0]  %s245, 128, %s5, [#allocation4]
    $region41: #{tpu_custom_call.1} parent=1 // pred_fallthru
      _
    // Predicated region
    $region42: #{tpu_custom_call.1} parent=1 // pred_check
      _
    $region43: #{tpu_custom_call.1} parent=1 // pred_check_branch
      %249 = sbr.rel (0) target = $region45
    $region44: #{tpu_custom_call.1} parent=1 // pred_region
      %250 = dma.done [#allocation4], 128
    $region45: #{tpu_custom_call.1} parent=1 // pred_fallthru
      _
    %251 = vsyncpa [#allocation3], 1
    %252 = vsyncpa [#allocation6], 1
    %253 = vsyncpa [#allocation9], 1
    %254 = vsyncpa [#allocation4], 1

</llo_original>
